<compile_context>
chip_gen: v5e
topology: v5e:2x2
jax: 0.10.0
libtpu: 0.0.40
codegen_flags: <defaults>
</compile_context>

<pallas_src>
import functools

import jax
import jax.numpy as jnp
from jax.experimental import pallas as pl
from jax.experimental.pallas import tpu as pltpu

SUBLANE = 8  # batch tile must be a multiple of the sublane width


def _round_up(n, m):
    return ((n + m - 1) // m) * m


def _mlp_kernel(x_ref, w1_ref, b1_ref, w2_ref, b2_ref, o_ref):
    # Fused two-layer MLP tile: in-kernel bf16 cast of the activations, bf16
    # matmuls on the MXU with f32 accumulation, bias + ReLU in f32 on the VPU.
    x = x_ref[...].astype(jnp.bfloat16)                               # (tb, obs)
    h = jnp.dot(x, w1_ref[...], preferred_element_type=jnp.float32)   # (tb, H) f32
    h = jnp.maximum(h + b1_ref[...], 0.0).astype(jnp.bfloat16)
    y = jnp.dot(h, w2_ref[...], preferred_element_type=jnp.float32)   # (tb, H) f32
    o_ref[...] = jnp.maximum(y + b2_ref[...], 0.0).astype(o_ref.dtype)


def prepare_params(w1, b1, w2, b2):
    """One-time setup of the frozen parameters (do NOT call per forward).

    Weight matrices are cast to bf16 (native MXU dtype); biases stay f32
    (added to the f32 accumulator inside the kernel).  Weights are (in, out),
    the kernel computes x @ W + b.
    """
    return (w1.astype(jnp.bfloat16),
            b1.astype(jnp.float32).reshape(1, -1),
            w2.astype(jnp.bfloat16),
            b2.astype(jnp.float32).reshape(1, -1))


@functools.partial(jax.jit, static_argnames=("block_b",))
def frozen_network_forward(x, w1, b1, w2, b2, *, block_b=4096):
    """x: (B, obs) f32; (w1, b1, w2, b2) as produced by prepare_params.
    Returns (B, H) f32.

    NOTE: for tiny inference batches (a handful of rows) a plain fused XLA
    matmul pair is cheaper than any pallas_call; keep this kernel for the
    large-batch rollout / training path.
    """
    B, obs = x.shape
    H = w1.shape[1]

    # Batch tile: at most block_b rows, at most ceil(B/2) (so the grid has
    # >= 2 steps whenever possible and both TensorCores get work on v7x),
    # always a multiple of the sublane width.  The trailing partial block is
    # masked by Pallas, so B need not be a multiple of tb.
    tb = min(max(_round_up(block_b, SUBLANE), SUBLANE),
             _round_up(pl.cdiv(B, 2), SUBLANE))
    tb = max(tb, SUBLANE)
    grid = (pl.cdiv(B, tb),)

    cost = pl.CostEstimate(
        flops=2 * B * obs * H + 2 * B * H * H,
        transcendentals=0,
        bytes_accessed=(B * obs * 4 + B * H * 4          # x in, y out (f32)
                        + obs * H * 2 + H * H * 2        # bf16 weights
                        + 2 * H * 4),                    # f32 biases
    )

    return pl.pallas_call(
        _mlp_kernel,
        out_shape=jax.ShapeDtypeStruct((B, H), jnp.float32),
        grid=grid,
        in_specs=[
            # x streams per batch tile at its real width (no padding pass).
            pl.BlockSpec((tb, obs), lambda i: (i, 0)),
            # Frozen weights/biases: constant block index -> VMEM-resident
            # across all grid steps (no re-DMA per tile).
            pl.BlockSpec((obs, H), lambda i: (0, 0)),
            pl.BlockSpec((1, H), lambda i: (0, 0)),
            pl.BlockSpec((H, H), lambda i: (0, 0)),
            pl.BlockSpec((1, H), lambda i: (0, 0)),
        ],
        # Real (B, H) output: exactly the useful bytes written, no post-slice.
        out_specs=pl.BlockSpec((tb, H), lambda i: (i, 0)),
        compiler_params=pltpu.CompilerParams(
            # Batch axis is embarrassingly parallel -> megacore sharding.
            dimension_semantics=("parallel",),
            # Tiny working set; explicit cap keeps us inside v7x's smaller
            # (32 MiB scoped / 64 MiB physical) VMEM budget.
            vmem_limit_bytes=32 * 1024 * 1024,
        ),
        cost_estimate=cost,
    )(x, w1, b1, w2, b2)


def init_params(key, observation_size, network_size):
    """Deterministic init mimicking PyTorch nn.Linear default
    (U[-1/sqrt(fan_in), 1/sqrt(fan_in)]).  Returns f32 (in, out) weights."""
    k1, k2, k3, k4 = jax.random.split(key, 4)
    bound1 = 1.0 / jnp.sqrt(observation_size)
    bound2 = 1.0 / jnp.sqrt(network_size)
    # PyTorch stores weight as (out, in); build (out, in) then transpose.
    w1_pt = jax.random.uniform(k1, (network_size, observation_size),
                               jnp.float32, -bound1, bound1)
    b1 = jax.random.uniform(k2, (1, network_size), jnp.float32, -bound1, bound1)
    w2_pt = jax.random.uniform(k3, (network_size, network_size),
                               jnp.float32, -bound2, bound2)
    b2 = jax.random.uniform(k4, (1, network_size), jnp.float32, -bound2, bound2)
    return w1_pt.T, b1, w2_pt.T, b2


def reference_forward_f32(x, w1, b1, w2, b2):
    """Pure f32 reference (original module semantics)."""
    h = jnp.maximum(x @ w1 + b1, 0.0)
    return jnp.maximum(h @ w2 + b2, 0.0)


def reference_forward_bf16(x, w1_bf16, b1, w2_bf16, b2):
    """Reference matching the kernel's numerics (bf16 inputs, f32 accum)."""
    xb = x.astype(jnp.bfloat16)
    h = jnp.dot(xb, w1_bf16, preferred_element_type=jnp.float32) + b1
    h = jnp.maximum(h, 0.0).astype(jnp.bfloat16)
    y = jnp.dot(h, w2_bf16, preferred_element_type=jnp.float32) + b2
    return jnp.maximum(y, 0.0)


if __name__ == "__main__":
    observation_size = 16   # e.g. one-hot FrozenLake 4x4 grid state
    network_size = 32

    key = jax.random.PRNGKey(0)
    key_x, key_x2, key_p = jax.random.split(key, 3)
    w1, b1, w2, b2 = init_params(key_p, observation_size, network_size)
    params = prepare_params(w1, b1, w2, b2)   # one-time frozen-param setup

    # Small batch.
    x = jax.random.normal(key_x, (8, observation_size), jnp.float32)
    out = jax.block_until_ready(frozen_network_forward(x, *params))
    assert out.shape == (8, network_size)

    # Tight check against a numerics-matched (bf16-weight, f32-accum) reference.
    ref_bf16 = reference_forward_bf16(x, *params)
    assert jnp.allclose(out, ref_bf16, atol=1e-3, rtol=1e-3), \
        "mismatch vs bf16-matched reference (B=8)"

    # Loose check against the original full-f32 module semantics.
    ref_f32 = reference_forward_f32(x, w1, b1, w2, b2)
    assert jnp.allclose(out, ref_f32, atol=6e-2, rtol=6e-2), \
        "mismatch vs f32 reference (B=8)"

    # Larger, non-tile-multiple batch: exercises the multi-step grid
    # (>= 2 steps -> megacore on v7x) and the masked trailing block.
    x2 = jax.random.normal(key_x2, (1000, observation_size), jnp.float32)
    out2 = jax.block_until_ready(frozen_network_forward(x2, *params))
    assert out2.shape == (1000, network_size)
    ref2 = reference_forward_bf16(x2, *params)
    assert jnp.allclose(out2, ref2, atol=1e-3, rtol=1e-3), \
        "mismatch vs bf16-matched reference (B=1000)"

    print("KERNEL_OK")
</pallas_src>

<mosaic_0001>
module attributes {stable_mosaic.version = 11 : i64} {
  func.func @_mlp_kernel(%arg0: i32, %arg1: memref<8x16xf32, #tpu.memory_space<vmem>>, %arg2: memref<16x32xbf16, #tpu.memory_space<vmem>>, %arg3: memref<1x32xf32, #tpu.memory_space<vmem>>, %arg4: memref<32x32xbf16, #tpu.memory_space<vmem>>, %arg5: memref<1x32xf32, #tpu.memory_space<vmem>>, %arg6: memref<8x32xf32, #tpu.memory_space<vmem>>) attributes {dimension_semantics = [#tpu.dimension_semantics<parallel>], iteration_bounds = array<i64: 1>, scalar_prefetch = 0 : i64, scratch_operands = 0 : i64, tpu.core_type = #tpu.core_type<tc>, window_params = [{transform_indices = @transform_0, window_bounds = array<i64: 8, 16>}, {pipeline_mode = #tpu.pipeline_mode<synchronous>, transform_indices = @transform_1, window_bounds = array<i64: 16, 32>}, {pipeline_mode = #tpu.pipeline_mode<synchronous>, transform_indices = @transform_2, window_bounds = array<i64: 1, 32>}, {pipeline_mode = #tpu.pipeline_mode<synchronous>, transform_indices = @transform_3, window_bounds = array<i64: 32, 32>}, {pipeline_mode = #tpu.pipeline_mode<synchronous>, transform_indices = @transform_4, window_bounds = array<i64: 1, 32>}, {transform_indices = @transform_5, window_bounds = array<i64: 8, 32>}]} {
    %c0 = arith.constant 0 : index
    %c0_0 = arith.constant 0 : index
    %0 = vector.load %arg1[%c0, %c0_0] : memref<8x16xf32, #tpu.memory_space<vmem>>, vector<8x16xf32>
    %1 = arith.truncf %0 : vector<8x16xf32> to vector<8x16xbf16>
    %c0_1 = arith.constant 0 : index
    %c0_2 = arith.constant 0 : index
    %2 = vector.load %arg2[%c0_1, %c0_2] : memref<16x32xbf16, #tpu.memory_space<vmem>>, vector<16x32xbf16>
    %cst = arith.constant dense<0.000000e+00> : vector<8x32xf32>
    %3 = tpu.matmul %1, %2, %cst {dimension_numbers = #tpu.dot_dimension_numbers<[1], [0], [0], [1], [0, 0, 1, 1], [], []>} : vector<8x16xbf16>, vector<16x32xbf16>, vector<8x32xf32> -> vector<8x32xf32>
    %c0_3 = arith.constant 0 : index
    %c0_4 = arith.constant 0 : index
    %4 = vector.load %arg3[%c0_3, %c0_4] : memref<1x32xf32, #tpu.memory_space<vmem>>, vector<1x32xf32>
    %5 = vector.broadcast %4 : vector<1x32xf32> to vector<8x32xf32>
    %6 = arith.addf %3, %5 : vector<8x32xf32>
    %cst_5 = arith.constant 0.000000e+00 : f32
    %7 = vector.broadcast %cst_5 : f32 to vector<8x32xf32>
    %8 = arith.maximumf %6, %7 : vector<8x32xf32>
    %9 = arith.truncf %8 : vector<8x32xf32> to vector<8x32xbf16>
    %c0_6 = arith.constant 0 : index
    %c0_7 = arith.constant 0 : index
    %10 = vector.load %arg4[%c0_6, %c0_7] : memref<32x32xbf16, #tpu.memory_space<vmem>>, vector<32x32xbf16>
    %cst_8 = arith.constant dense<0.000000e+00> : vector<8x32xf32>
    %11 = tpu.matmul %9, %10, %cst_8 {dimension_numbers = #tpu.dot_dimension_numbers<[1], [0], [0], [1], [0, 0, 1, 1], [], []>} : vector<8x32xbf16>, vector<32x32xbf16>, vector<8x32xf32> -> vector<8x32xf32>
    %c0_9 = arith.constant 0 : index
    %c0_10 = arith.constant 0 : index
    %12 = vector.load %arg5[%c0_9, %c0_10] : memref<1x32xf32, #tpu.memory_space<vmem>>, vector<1x32xf32>
    %13 = vector.broadcast %12 : vector<1x32xf32> to vector<8x32xf32>
    %14 = arith.addf %11, %13 : vector<8x32xf32>
    %cst_11 = arith.constant 0.000000e+00 : f32
    %15 = vector.broadcast %cst_11 : f32 to vector<8x32xf32>
    %16 = arith.maximumf %14, %15 : vector<8x32xf32>
    %c0_12 = arith.constant 0 : index
    %c0_13 = arith.constant 0 : index
    %17 = vector.load %arg6[%c0_12, %c0_13] : memref<8x32xf32, #tpu.memory_space<vmem>>, vector<8x32xf32>
    tpu.vector_store %arg6[%c0_12, %c0_13], %16 {strides = array<i32>} : memref<8x32xf32, #tpu.memory_space<vmem>>, vector<8x32xf32>,
    return
  }
  func.func @transform_0(%arg0: i32) -> (i32, i32) {
    %c0_i32 = arith.constant 0 : i32
    %c0_i32_0 = arith.constant 0 : i32
    return %arg0, %c0_i32 : i32, i32
  }
  func.func @transform_1(%arg0: i32) -> (i32, i32) {
    %c0_i32 = arith.constant 0 : i32
    %c0_i32_0 = arith.constant 0 : i32
    %c0_i32_1 = arith.constant 0 : i32
    return %c0_i32, %c0_i32_0 : i32, i32
  }
  func.func @transform_2(%arg0: i32) -> (i32, i32) {
    %c0_i32 = arith.constant 0 : i32
    %c0_i32_0 = arith.constant 0 : i32
    %c0_i32_1 = arith.constant 0 : i32
    return %c0_i32, %c0_i32_0 : i32, i32
  }
  func.func @transform_3(%arg0: i32) -> (i32, i32) {
    %c0_i32 = arith.constant 0 : i32
    %c0_i32_0 = arith.constant 0 : i32
    %c0_i32_1 = arith.constant 0 : i32
    return %c0_i32, %c0_i32_0 : i32, i32
  }
  func.func @transform_4(%arg0: i32) -> (i32, i32) {
    %c0_i32 = arith.constant 0 : i32
    %c0_i32_0 = arith.constant 0 : i32
    %c0_i32_1 = arith.constant 0 : i32
    return %c0_i32, %c0_i32_0 : i32, i32
  }
  func.func @transform_5(%arg0: i32) -> (i32, i32) {
    %c0_i32 = arith.constant 0 : i32
    %c0_i32_0 = arith.constant 0 : i32
    return %arg0, %c0_i32 : i32, i32
  }
}

</mosaic_0001>

<llo_original>
// kernel: frozen_network_forward.1
$region0: #{frozen_network_forward.1}
  #allocation0 [shape = 'u32[]', space=smem, size = 0x4, offset = 0x4, fixed_abs, tag = 'smem constant byte address 0x4 - core index']
  #allocation1 [shape = 'u32[72,128]{1,0:T(1,128)}', space=vmem, size = 0x9000, scoped, tag = 'internal scratch']
  %s0 = inlined_call_operand.hbm [shape: f32[8,16], index: 0, kind: input, shape index: {}]
  %s1 = inlined_call_operand.hbm [shape: bf16[16,32], index: 1, kind: input, shape index: {}]
  %s2 = inlined_call_operand.vmem [shape: f32[1,32], index: 2, kind: input, shape index: {}]
  %s3 = inlined_call_operand.hbm [shape: bf16[32,32], index: 3, kind: input, shape index: {}]
  %s4 = inlined_call_operand.vmem [shape: f32[1,32], index: 4, kind: input, shape index: {}]
  %s5 = inlined_call_operand.hbm [shape: f32[8,32], index: 5, kind: output, shape index: {}]
  %s6 = sld [smem:[#allocation0]]
  $region42: #{frozen_network_forward.1} parent=0
    _
  %s8 = ssub.s32 1, %s6
  %s9 = scalar_select 0, %s8, %s6
  $region1: #{frozen_network_forward.1} parent=0
    #allocation2 [shape = 'u8[4096]{0}', space=vmem, size = 0x1000, scoped, tag = 'input window, operand 0, single buffered']
    #allocation3 [shape = 's32[1]{0}', space=sflag, size = 0x4, scoped, tag = 'scoped memory for frozen_network_forward.1']
    #allocation4 [shape = 's32[1]{0}', space=sflag, size = 0x4, scoped, tag = 'scoped memory for frozen_network_forward.1']
    #allocation5 [shape = 'u8[4096]{0}', space=vmem, size = 0x1000, scoped, tag = 'input window, operand 1, single buffered']
    #allocation6 [shape = 's32[1]{0}', space=sflag, size = 0x4, scoped, tag = 'scoped memory for frozen_network_forward.1']
    #allocation7 [shape = 'u8[8192]{0}', space=vmem, size = 0x2000, scoped, tag = 'input window, operand 3, single buffered']
    #allocation8 [shape = 'u8[4096]{0}', space=vmem, size = 0x1000, scoped, tag = 'output window, operand 0, single buffered']
    %10 = vsyncpa [#allocation3], 0
    %11 = vsyncpa [#allocation6], 0
    %12 = vsyncpa [#allocation4], 0
    // Predicated region
    $region2: #{frozen_network_forward.1} parent=1 // pred_check
      _
    $region3: #{frozen_network_forward.1} parent=1 // pred_check_branch
      %14 = sbr.rel (0) target = $region5
    $region4: #{frozen_network_forward.1} parent=1 // pred_region
      %16 = vsyncadd [#allocation3], 0
      %s18 = sshll.u32 %s0, 4
      %s19 = int_to_ptr.hbm [resolvable:$true] %s18
      %s20 = sshll.u32 [#allocation2], 4
      %s21 = int_to_ptr.vmem [resolvable:$true] %s20
      %23 = dma.hbm_to_vmem [thread:$0]  %s19, 128, %s21, [#allocation3]
    $region5: #{frozen_network_forward.1} parent=1 // pred_fallthru
      _
    // Predicated region
    $region6: #{frozen_network_forward.1} parent=1 // pred_check
      _
    $region7: #{frozen_network_forward.1} parent=1 // pred_check_branch
      %25 = sbr.rel (0) target = $region9
    $region8: #{frozen_network_forward.1} parent=1 // pred_region
      %27 = vsyncadd [#allocation6], 0
      %s28 = sshll.u32 %s1, 4
      %s29 = int_to_ptr.hbm [resolvable:$true] %s28
      %s30 = sshll.u32 [#allocation5], 4
      %s31 = int_to_ptr.vmem [resolvable:$true] %s30
      %36 = dma.hbm_to_vmem [thread:$0]  %s29, 128, %s31, [#allocation6], 64, 64, 4
    $region9: #{frozen_network_forward.1} parent=1 // pred_fallthru
      _
    // Predicated region
    $region10: #{frozen_network_forward.1} parent=1 // pred_check
      _
    $region11: #{frozen_network_forward.1} parent=1 // pred_check_branch
      %38 = sbr.rel (0) target = $region13
    $region12: #{frozen_network_forward.1} parent=1 // pred_region
      _
    $region13: #{frozen_network_forward.1} parent=1 // pred_fallthru
      _
    // Predicated region
    $region14: #{frozen_network_forward.1} parent=1 // pred_check
      _
    $region15: #{frozen_network_forward.1} parent=1 // pred_check_branch
      %40 = sbr.rel (0) target = $region17
    $region16: #{frozen_network_forward.1} parent=1 // pred_region
      %42 = vsyncadd [#allocation6], 0
      %s43 = sshll.u32 %s3, 4
      %s44 = int_to_ptr.hbm [resolvable:$true] %s43
      %s45 = sshll.u32 [#allocation7], 4
      %s46 = int_to_ptr.vmem [resolvable:$true] %s45
      %51 = dma.hbm_to_vmem [thread:$0]  %s44, 256, %s46, [#allocation6], 64, 64, 4
    $region17: #{frozen_network_forward.1} parent=1 // pred_fallthru
      _
    // Predicated region
    $region18: #{frozen_network_forward.1} parent=1 // pred_check
      _
    $region19: #{frozen_network_forward.1} parent=1 // pred_check_branch
      %53 = sbr.rel (0) target = $region21
    $region20: #{frozen_network_forward.1} parent=1 // pred_region
      _
    $region21: #{frozen_network_forward.1} parent=1 // pred_fallthru
      _
    // Predicated region
    $region22: #{frozen_network_forward.1} parent=1 // pred_check
      _
    $region23: #{frozen_network_forward.1} parent=1 // pred_check_branch
      %55 = sbr.rel (0) target = $region25
    $region24: #{frozen_network_forward.1} parent=1 // pred_region
      %57 = dma.done [#allocation3], 128
    $region25: #{frozen_network_forward.1} parent=1 // pred_fallthru
      _
    // Predicated region
    $region26: #{frozen_network_forward.1} parent=1 // pred_check
      _
    $region27: #{frozen_network_forward.1} parent=1 // pred_check_branch
      %59 = sbr.rel (0) target = $region29
    $region28: #{frozen_network_forward.1} parent=1 // pred_region
      %61 = dma.done [#allocation6], 128
    $region29: #{frozen_network_forward.1} parent=1 // pred_fallthru
      _
    // Predicated region
    $region30: #{frozen_network_forward.1} parent=1 // pred_check
      _
    $region31: #{frozen_network_forward.1} parent=1 // pred_check_branch
      %63 = sbr.rel (0) target = $region33
    $region32: #{frozen_network_forward.1} parent=1 // pred_region
      %65 = dma.done [#allocation6], 256
    $region33: #{frozen_network_forward.1} parent=1 // pred_fallthru
      _
    %v67 = vld [vmem:[#allocation2] sm:$0xff]
    %v68 = vpack.c.bf16 %v67, %v67
    %v69 = vld [vmem:[#allocation5] sm:$0xf]
    %v70 = vld [vmem:[#allocation5 + $0x4] sm:$0xf]
    %v71 = vld [vmem:[%s2] sm:$0x1]
    %v73 = vperm.slane %v71, 0
    %v77 = vunpack.c.l.b16 %v69
    %v78 = vunpack.c.l.b16 %v70
    %v79 = vpack.c.b16 %v78, %v77
    %vm81 = vcmask 130048
    %v83 = vsel %vm81, %v68, 0
    %85 = vmatpush.bf16.msra.mxu0 0
    %86 = vmatpush.bf16.msra.mxu0 0
    %87 = vmatpush.bf16.msra.mxu0 0
    %88 = vmatpush.bf16.msra.mxu0 0
    %89 = vmatpush.bf16.msra.mxu0 0
    %90 = vmatpush.bf16.msra.mxu0 0
    %91 = vmatpush.bf16.msra.mxu0 0
    %92 = vmatpush.bf16.msra.mxu0 %v79
    %93 = vmatmul.bf16.gmra.mxu0 %v83
    %v94 = vpop.f32.mrf.mxu0
    %v95 = vadd.f32 %v73, %v94
    %v96 = vpop.f32.mrf.mxu0
    %97 = vdwg.mxu0
    %v98 = vmax.f32 %v95, 0.0
    %v99 = vpack.c.bf16 %v98, %v98
    %v100 = vld [vmem:[#allocation7] sm:$0xf]
    %v101 = vld [vmem:[#allocation7 + $0x4] sm:$0xf]
    %v102 = vld [vmem:[#allocation7 + $0x8] sm:$0xf]
    %v103 = vld [vmem:[#allocation7 + $0xc] sm:$0xf]
    %v104 = vld [vmem:[%s4] sm:$0x1]
    %v106 = vperm.slane %v104, 0
    %v112 = vunpack.c.l.b16 %v100
    %v113 = vunpack.c.l.b16 %v101
    %v114 = vunpack.c.l.b16 %v102
    %v115 = vunpack.c.l.b16 %v103
    %v116 = vpack.c.b16 %v113, %v112
    %v117 = vpack.c.b16 %v115, %v114
    %vm120 = vcmask 261120
    %v122 = vsel %vm120, %v99, 0
    %124 = vmatpush.bf16.msra.mxu0 0
    %125 = vmatpush.bf16.msra.mxu0 0
    %126 = vmatpush.bf16.msra.mxu0 0
    %127 = vmatpush.bf16.msra.mxu0 0
    %128 = vmatpush.bf16.msra.mxu0 0
    %129 = vmatpush.bf16.msra.mxu0 0
    %130 = vmatpush.bf16.msra.mxu0 %v117
    %131 = vmatpush.bf16.msra.mxu0 %v116
    %132 = vmatmul.bf16.gmra.mxu0 %v122
    %v133 = vpop.f32.mrf.mxu0
    %v134 = vadd.f32 %v106, %v133
    %v135 = vpop.f32.mrf.mxu0
    %136 = vdwg.mxu0
    %v137 = vmax.f32 %v134, 0.0
    %138 = vst.msk [vmem:[#allocation8] sm:$0xff] %vm120, %v137
    // Predicated region
    $region34: #{frozen_network_forward.1} parent=1 // pred_check
      _
    $region35: #{frozen_network_forward.1} parent=1 // pred_check_branch
      %140 = sbr.rel (0) target = $region37
    $region36: #{frozen_network_forward.1} parent=1 // pred_region
      %142 = vsyncadd [#allocation4], 0
      %s144 = sshll.u32 [#allocation8], 4
      %s145 = int_to_ptr.vmem [resolvable:$true] %s144
      %s146 = sshll.u32 %s5, 4
      %s147 = int_to_ptr.hbm [resolvable:$true] %s146
      %149 = dma.vmem_to_hbm [thread:$0]  %s145, 128, %s147, [#allocation4]
    $region37: #{frozen_network_forward.1} parent=1 // pred_fallthru
      _
    // Predicated region
    $region38: #{frozen_network_forward.1} parent=1 // pred_check
      _
    $region39: #{frozen_network_forward.1} parent=1 // pred_check_branch
      %151 = sbr.rel (0) target = $region41
    $region40: #{frozen_network_forward.1} parent=1 // pred_region
      %153 = dma.done [#allocation4], 128
    $region41: #{frozen_network_forward.1} parent=1 // pred_fallthru
      _
    %154 = vsyncpa [#allocation3], 1
    %155 = vsyncpa [#allocation6], 1
    %156 = vsyncpa [#allocation4], 1

</llo_original>
